<compile_context>
chip_gen: v5e
topology: v5e:2x2
jax: 0.10.0
libtpu: 0.0.40
codegen_flags: <defaults>
</compile_context>

<pallas_src>
import math

import jax
import jax.numpy as jnp
from jax.experimental import pallas as pl
from jax.experimental.pallas import tpu as pltpu


# ----------------------------- kernel ---------------------------------------


def _enet_kernel(x_ref,
                 w1_ref, b1_ref,
                 w2_ref, b2_ref,
                 w3_ref, b3_ref,
                 w4_ref, b4_ref,
                 o_ref):
    cd = w1_ref.dtype  # compute dtype for MXU inputs (bf16), f32 accumulate

    # Layer 0: Linear(input_dim -> hidden) + ReLU
    h = jnp.dot(x_ref[...].astype(cd), w1_ref[...],
                preferred_element_type=jnp.float32)
    h = jnp.maximum(h + b1_ref[...], 0.0)

    # Hidden layer 1: Linear(hidden -> hidden) + ReLU
    h = jnp.dot(h.astype(cd), w2_ref[...], preferred_element_type=jnp.float32)
    h = jnp.maximum(h + b2_ref[...], 0.0)

    # Hidden layer 2: Linear(hidden -> hidden) + ReLU
    h = jnp.dot(h.astype(cd), w3_ref[...], preferred_element_type=jnp.float32)
    h = jnp.maximum(h + b3_ref[...], 0.0)

    # Output layer: Linear(hidden -> num_actions) + Sigmoid
    logits = jnp.dot(h.astype(cd), w4_ref[...],
                     preferred_element_type=jnp.float32) + b4_ref[...]
    o_ref[...] = jax.nn.sigmoid(logits)


# ----------------------------- wrapper ---------------------------------------


def _round_up(n, m):
    return ((n + m - 1) // m) * m


def _pad_axis(a, axis, target):
    pad = target - a.shape[axis]
    if pad == 0:
        return a
    widths = [(0, 0)] * a.ndim
    widths[axis] = (0, pad)
    return jnp.pad(a, widths)


def enet_forward(x, params, *, tb=256, compute_dtype=jnp.bfloat16):
    """Fused Enet forward.

    params = (w1, b1, w2, b2, w3, b3, w4, b4); weights are [in, out]
    (transposed vs PyTorch), biases are [1, out].
    tb: batch tile. 256 fills the v6e/v7x MXU; 128 already saturates v5e.
    """
    w1, b1, w2, b2, w3, b3, w4, b4 = params
    B, input_dim = x.shape
    hidden = w1.shape[1]
    num_actions = w4.shape[1]

    # Lane-dense padding (zero pads keep results bit-identical).
    K = _round_up(input_dim, 128)
    H = _round_up(hidden, 128)
    A = _round_up(num_actions, 128)
    tb_eff = min(tb, _round_up(B, 8))
    B_pad = _round_up(B, tb_eff)

    xp = _pad_axis(_pad_axis(x.astype(jnp.float32), 1, K), 0, B_pad)
    w1p = _pad_axis(_pad_axis(w1, 0, K), 1, H).astype(compute_dtype)
    w2p = _pad_axis(_pad_axis(w2, 0, H), 1, H).astype(compute_dtype)
    w3p = _pad_axis(_pad_axis(w3, 0, H), 1, H).astype(compute_dtype)
    w4p = _pad_axis(_pad_axis(w4, 0, H), 1, A).astype(compute_dtype)
    b1p = _pad_axis(b1, 1, H).astype(jnp.float32)
    b2p = _pad_axis(b2, 1, H).astype(jnp.float32)
    b3p = _pad_axis(b3, 1, H).astype(jnp.float32)
    b4p = _pad_axis(b4, 1, A).astype(jnp.float32)

    weights = (w1p, b1p, w2p, b2p, w3p, b3p, w4p, b4p)
    grid = (B_pad // tb_eff,)

    # Weights/biases stay resident in VMEM (constant index map); x / out tiles
    # stream over the batch grid and get double-buffered by Pallas.
    x_spec = pl.BlockSpec((tb_eff, K), lambda i: (i, 0))
    w_specs = [pl.BlockSpec(p.shape, lambda i: (0, 0)) for p in weights]
    out_spec = pl.BlockSpec((tb_eff, A), lambda i: (i, 0))

    # VMEM budget: resident weights + double-buffered in/out tiles + activation
    # temporaries (generous), clamped to a range that is safe on v5e/v6e/v7x.
    weight_bytes = sum(int(p.size) * p.dtype.itemsize for p in weights)
    tile_bytes = 2 * tb_eff * K * 4 + 2 * tb_eff * A * 4
    act_bytes = 4 * tb_eff * H * 4
    est = weight_bytes + tile_bytes + act_bytes
    vmem_limit = int(min(max(2 * est, 16 * 2**20), 48 * 2**20))

    cost = pl.CostEstimate(
        flops=int(2 * B_pad * (K * H + H * H + H * H + H * A)),
        transcendentals=int(B_pad * A),
        bytes_accessed=int(xp.size * 4 + B_pad * A * 4 + weight_bytes),
    )

    out = pl.pallas_call(
        _enet_kernel,
        out_shape=jax.ShapeDtypeStruct((B_pad, A), jnp.float32),
        grid=grid,
        in_specs=[x_spec] + w_specs,
        out_specs=out_spec,
        compiler_params=pltpu.CompilerParams(
            dimension_semantics=("parallel",),
            vmem_limit_bytes=vmem_limit,
        ),
        cost_estimate=cost,
    )(xp, *weights)

    return out[:B, :num_actions]


# ----------------------------- params ----------------------------------------


def _torch_linear_init(key, fan_in, fan_out):
    """Mimic nn.Linear default init: U(-1/sqrt(fan_in), 1/sqrt(fan_in))."""
    kw, kb = jax.random.split(key)
    bound = 1.0 / math.sqrt(fan_in)
    # stored as [in, out] (transpose of PyTorch's [out, in])
    w = jax.random.uniform(kw, (fan_in, fan_out), jnp.float32, -bound, bound)
    b = jax.random.uniform(kb, (1, fan_out), jnp.float32, -bound, bound)
    return w, b


def make_enet_params(key, num_actions, input_dim, num_hidden=2, hidden_size=512):
    # TODO(synk): kernel is specialized to num_hidden=2 (the module default);
    # other depths would need a variant kernel.
    assert num_hidden == 2
    keys = jax.random.split(key, num_hidden + 2)
    params = []
    w, b = _torch_linear_init(keys[0], input_dim, hidden_size)
    params += [w, b]
    for i in range(num_hidden):
        w, b = _torch_linear_init(keys[1 + i], hidden_size, hidden_size)
        params += [w, b]
    # Final layer: Enet.set_weights() zeroes the last Linear's weight and bias.
    params += [jnp.zeros((hidden_size, num_actions), jnp.float32),
               jnp.zeros((1, num_actions), jnp.float32)]
    return tuple(params)


# ----------------------------- test harness ----------------------------------


if __name__ == "__main__":
    batch = 8
    input_dim = 32
    hidden_size = 32
    num_hidden = 2
    num_actions = 4

    key = jax.random.PRNGKey(0)
    kx, kp = jax.random.split(key)
    x = jax.random.normal(kx, (batch, input_dim), jnp.float32)
    params = make_enet_params(kp, num_actions, input_dim,
                              num_hidden=num_hidden, hidden_size=hidden_size)

    out = jax.block_until_ready(enet_forward(x, params))
    assert out.shape == (batch, num_actions)
    # Zeroed final layer (set_weights) -> sigmoid(0) = 0.5 everywhere.
    assert bool(jnp.allclose(out, 0.5, atol=1e-6))

    # Exercise the batch grid + padding path (grid > 1, B not a tile multiple).
    x2 = jax.random.normal(jax.random.PRNGKey(1), (20, input_dim), jnp.float32)
    out2 = jax.block_until_ready(enet_forward(x2, params, tb=8))
    assert out2.shape == (20, num_actions)
    assert bool(jnp.allclose(out2, 0.5, atol=1e-6))

    print("KERNEL_OK")
</pallas_src>

<mosaic_0001>
module attributes {stable_mosaic.version = 11 : i64} {
  func.func @_enet_kernel(%arg0: i32, %arg1: memref<8x128xf32, #tpu.memory_space<vmem>>, %arg2: memref<128x128xbf16, #tpu.memory_space<vmem>>, %arg3: memref<1x128xf32, #tpu.memory_space<vmem>>, %arg4: memref<128x128xbf16, #tpu.memory_space<vmem>>, %arg5: memref<1x128xf32, #tpu.memory_space<vmem>>, %arg6: memref<128x128xbf16, #tpu.memory_space<vmem>>, %arg7: memref<1x128xf32, #tpu.memory_space<vmem>>, %arg8: memref<128x128xbf16, #tpu.memory_space<vmem>>, %arg9: memref<1x128xf32, #tpu.memory_space<vmem>>, %arg10: memref<8x128xf32, #tpu.memory_space<vmem>>) attributes {dimension_semantics = [#tpu.dimension_semantics<parallel>], iteration_bounds = array<i64: 1>, scalar_prefetch = 0 : i64, scratch_operands = 0 : i64, tpu.core_type = #tpu.core_type<tc>, window_params = [{transform_indices = @transform_0, window_bounds = array<i64: 8, 128>}, {pipeline_mode = #tpu.pipeline_mode<synchronous>, transform_indices = @transform_1, window_bounds = array<i64: 128, 128>}, {pipeline_mode = #tpu.pipeline_mode<synchronous>, transform_indices = @transform_2, window_bounds = array<i64: 1, 128>}, {pipeline_mode = #tpu.pipeline_mode<synchronous>, transform_indices = @transform_3, window_bounds = array<i64: 128, 128>}, {pipeline_mode = #tpu.pipeline_mode<synchronous>, transform_indices = @transform_4, window_bounds = array<i64: 1, 128>}, {pipeline_mode = #tpu.pipeline_mode<synchronous>, transform_indices = @transform_5, window_bounds = array<i64: 128, 128>}, {pipeline_mode = #tpu.pipeline_mode<synchronous>, transform_indices = @transform_6, window_bounds = array<i64: 1, 128>}, {pipeline_mode = #tpu.pipeline_mode<synchronous>, transform_indices = @transform_7, window_bounds = array<i64: 128, 128>}, {pipeline_mode = #tpu.pipeline_mode<synchronous>, transform_indices = @transform_8, window_bounds = array<i64: 1, 128>}, {transform_indices = @transform_9, window_bounds = array<i64: 8, 128>}]} {
    %c0 = arith.constant 0 : index
    %c0_0 = arith.constant 0 : index
    %0 = vector.load %arg1[%c0, %c0_0] : memref<8x128xf32, #tpu.memory_space<vmem>>, vector<8x128xf32>
    %1 = arith.truncf %0 : vector<8x128xf32> to vector<8x128xbf16>
    %c0_1 = arith.constant 0 : index
    %c0_2 = arith.constant 0 : index
    %2 = vector.load %arg2[%c0_1, %c0_2] : memref<128x128xbf16, #tpu.memory_space<vmem>>, vector<128x128xbf16>
    %cst = arith.constant dense<0.000000e+00> : vector<8x128xf32>
    %3 = tpu.matmul %1, %2, %cst {dimension_numbers = #tpu.dot_dimension_numbers<[1], [0], [0], [1], [0, 0, 1, 1], [], []>} : vector<8x128xbf16>, vector<128x128xbf16>, vector<8x128xf32> -> vector<8x128xf32>
    %c0_3 = arith.constant 0 : index
    %c0_4 = arith.constant 0 : index
    %4 = vector.load %arg3[%c0_3, %c0_4] : memref<1x128xf32, #tpu.memory_space<vmem>>, vector<1x128xf32>
    %5 = vector.broadcast %4 : vector<1x128xf32> to vector<8x128xf32>
    %6 = arith.addf %3, %5 : vector<8x128xf32>
    %cst_5 = arith.constant 0.000000e+00 : f32
    %7 = vector.broadcast %cst_5 : f32 to vector<8x128xf32>
    %8 = arith.maximumf %6, %7 : vector<8x128xf32>
    %9 = arith.truncf %8 : vector<8x128xf32> to vector<8x128xbf16>
    %c0_6 = arith.constant 0 : index
    %c0_7 = arith.constant 0 : index
    %10 = vector.load %arg4[%c0_6, %c0_7] : memref<128x128xbf16, #tpu.memory_space<vmem>>, vector<128x128xbf16>
    %cst_8 = arith.constant dense<0.000000e+00> : vector<8x128xf32>
    %11 = tpu.matmul %9, %10, %cst_8 {dimension_numbers = #tpu.dot_dimension_numbers<[1], [0], [0], [1], [0, 0, 1, 1], [], []>} : vector<8x128xbf16>, vector<128x128xbf16>, vector<8x128xf32> -> vector<8x128xf32>
    %c0_9 = arith.constant 0 : index
    %c0_10 = arith.constant 0 : index
    %12 = vector.load %arg5[%c0_9, %c0_10] : memref<1x128xf32, #tpu.memory_space<vmem>>, vector<1x128xf32>
    %13 = vector.broadcast %12 : vector<1x128xf32> to vector<8x128xf32>
    %14 = arith.addf %11, %13 : vector<8x128xf32>
    %cst_11 = arith.constant 0.000000e+00 : f32
    %15 = vector.broadcast %cst_11 : f32 to vector<8x128xf32>
    %16 = arith.maximumf %14, %15 : vector<8x128xf32>
    %17 = arith.truncf %16 : vector<8x128xf32> to vector<8x128xbf16>
    %c0_12 = arith.constant 0 : index
    %c0_13 = arith.constant 0 : index
    %18 = vector.load %arg6[%c0_12, %c0_13] : memref<128x128xbf16, #tpu.memory_space<vmem>>, vector<128x128xbf16>
    %cst_14 = arith.constant dense<0.000000e+00> : vector<8x128xf32>
    %19 = tpu.matmul %17, %18, %cst_14 {dimension_numbers = #tpu.dot_dimension_numbers<[1], [0], [0], [1], [0, 0, 1, 1], [], []>} : vector<8x128xbf16>, vector<128x128xbf16>, vector<8x128xf32> -> vector<8x128xf32>
    %c0_15 = arith.constant 0 : index
    %c0_16 = arith.constant 0 : index
    %20 = vector.load %arg7[%c0_15, %c0_16] : memref<1x128xf32, #tpu.memory_space<vmem>>, vector<1x128xf32>
    %21 = vector.broadcast %20 : vector<1x128xf32> to vector<8x128xf32>
    %22 = arith.addf %19, %21 : vector<8x128xf32>
    %cst_17 = arith.constant 0.000000e+00 : f32
    %23 = vector.broadcast %cst_17 : f32 to vector<8x128xf32>
    %24 = arith.maximumf %22, %23 : vector<8x128xf32>
    %25 = arith.truncf %24 : vector<8x128xf32> to vector<8x128xbf16>
    %c0_18 = arith.constant 0 : index
    %c0_19 = arith.constant 0 : index
    %26 = vector.load %arg8[%c0_18, %c0_19] : memref<128x128xbf16, #tpu.memory_space<vmem>>, vector<128x128xbf16>
    %cst_20 = arith.constant dense<0.000000e+00> : vector<8x128xf32>
    %27 = tpu.matmul %25, %26, %cst_20 {dimension_numbers = #tpu.dot_dimension_numbers<[1], [0], [0], [1], [0, 0, 1, 1], [], []>} : vector<8x128xbf16>, vector<128x128xbf16>, vector<8x128xf32> -> vector<8x128xf32>
    %c0_21 = arith.constant 0 : index
    %c0_22 = arith.constant 0 : index
    %28 = vector.load %arg9[%c0_21, %c0_22] : memref<1x128xf32, #tpu.memory_space<vmem>>, vector<1x128xf32>
    %29 = vector.broadcast %28 : vector<1x128xf32> to vector<8x128xf32>
    %30 = arith.addf %27, %29 : vector<8x128xf32>
    %31 = arith.negf %30 : vector<8x128xf32>
    %32 = math.exp %31 : vector<8x128xf32>
    %cst_23 = arith.constant 1.000000e+00 : f32
    %33 = vector.broadcast %cst_23 : f32 to vector<8x128xf32>
    %34 = arith.addf %33, %32 : vector<8x128xf32>
    %35 = arith.divf %33, %34 : vector<8x128xf32>
    %c0_24 = arith.constant 0 : index
    %c0_25 = arith.constant 0 : index
    %36 = vector.load %arg10[%c0_24, %c0_25] : memref<8x128xf32, #tpu.memory_space<vmem>>, vector<8x128xf32>
    tpu.vector_store %arg10[%c0_24, %c0_25], %35 {strides = array<i32>} : memref<8x128xf32, #tpu.memory_space<vmem>>, vector<8x128xf32>,
    return
  }
  func.func @transform_0(%arg0: i32) -> (i32, i32) {
    %c0_i32 = arith.constant 0 : i32
    %c0_i32_0 = arith.constant 0 : i32
    return %arg0, %c0_i32 : i32, i32
  }
  func.func @transform_1(%arg0: i32) -> (i32, i32) {
    %c0_i32 = arith.constant 0 : i32
    %c0_i32_0 = arith.constant 0 : i32
    %c0_i32_1 = arith.constant 0 : i32
    return %c0_i32, %c0_i32_0 : i32, i32
  }
  func.func @transform_2(%arg0: i32) -> (i32, i32) {
    %c0_i32 = arith.constant 0 : i32
    %c0_i32_0 = arith.constant 0 : i32
    %c0_i32_1 = arith.constant 0 : i32
    return %c0_i32, %c0_i32_0 : i32, i32
  }
  func.func @transform_3(%arg0: i32) -> (i32, i32) {
    %c0_i32 = arith.constant 0 : i32
    %c0_i32_0 = arith.constant 0 : i32
    %c0_i32_1 = arith.constant 0 : i32
    return %c0_i32, %c0_i32_0 : i32, i32
  }
  func.func @transform_4(%arg0: i32) -> (i32, i32) {
    %c0_i32 = arith.constant 0 : i32
    %c0_i32_0 = arith.constant 0 : i32
    %c0_i32_1 = arith.constant 0 : i32
    return %c0_i32, %c0_i32_0 : i32, i32
  }
  func.func @transform_5(%arg0: i32) -> (i32, i32) {
    %c0_i32 = arith.constant 0 : i32
    %c0_i32_0 = arith.constant 0 : i32
    %c0_i32_1 = arith.constant 0 : i32
    return %c0_i32, %c0_i32_0 : i32, i32
  }
  func.func @transform_6(%arg0: i32) -> (i32, i32) {
    %c0_i32 = arith.constant 0 : i32
    %c0_i32_0 = arith.constant 0 : i32
    %c0_i32_1 = arith.constant 0 : i32
    return %c0_i32, %c0_i32_0 : i32, i32
  }
  func.func @transform_7(%arg0: i32) -> (i32, i32) {
    %c0_i32 = arith.constant 0 : i32
    %c0_i32_0 = arith.constant 0 : i32
    %c0_i32_1 = arith.constant 0 : i32
    return %c0_i32, %c0_i32_0 : i32, i32
  }
  func.func @transform_8(%arg0: i32) -> (i32, i32) {
    %c0_i32 = arith.constant 0 : i32
    %c0_i32_0 = arith.constant 0 : i32
    %c0_i32_1 = arith.constant 0 : i32
    return %c0_i32, %c0_i32_0 : i32, i32
  }
  func.func @transform_9(%arg0: i32) -> (i32, i32) {
    %c0_i32 = arith.constant 0 : i32
    %c0_i32_0 = arith.constant 0 : i32
    return %arg0, %c0_i32 : i32, i32
  }
}

</mosaic_0001>

<llo_original>
// kernel: tpu_custom_call.1
$region0: #{tpu_custom_call.1}
  #allocation0 [shape = 'u32[]', space=smem, size = 0x4, offset = 0x4, fixed_abs, tag = 'smem constant byte address 0x4 - core index']
  #allocation1 [shape = 'u32[72,128]{1,0:T(1,128)}', space=vmem, size = 0x9000, scoped, tag = 'internal scratch']
  %s0 = inlined_call_operand.hbm [shape: f32[8,128], index: 0, kind: input, shape index: {}]
  %s1 = inlined_call_operand.hbm [shape: bf16[128,128], index: 1, kind: input, shape index: {}]
  %s2 = inlined_call_operand.vmem [shape: f32[1,128], index: 2, kind: input, shape index: {}]
  %s3 = inlined_call_operand.hbm [shape: bf16[128,128], index: 3, kind: input, shape index: {}]
  %s4 = inlined_call_operand.vmem [shape: f32[1,128], index: 4, kind: input, shape index: {}]
  %s5 = inlined_call_operand.hbm [shape: bf16[128,128], index: 5, kind: input, shape index: {}]
  %s6 = inlined_call_operand.vmem [shape: f32[1,128], index: 6, kind: input, shape index: {}]
  %s7 = inlined_call_operand.hbm [shape: bf16[128,128], index: 7, kind: input, shape index: {}]
  %s8 = inlined_call_operand.vmem [shape: f32[1,128], index: 8, kind: input, shape index: {}]
  %s9 = inlined_call_operand.hbm [shape: f32[8,128], index: 9, kind: output, shape index: {}]
  %s10 = sld [smem:[#allocation0]]
  $region66: #{tpu_custom_call.1} parent=0
    _
  %s12 = ssub.s32 1, %s10
  %s13 = scalar_select 0, %s12, %s10
  $region1: #{tpu_custom_call.1} parent=0
    #allocation2 [shape = 'u8[4096]{0}', space=vmem, size = 0x1000, scoped, tag = 'input window, operand 0, single buffered']
    #allocation3 [shape = 's32[1]{0}', space=sflag, size = 0x4, scoped, tag = 'scoped memory for tpu_custom_call.1']
    #allocation4 [shape = 's32[1]{0}', space=sflag, size = 0x4, scoped, tag = 'scoped memory for tpu_custom_call.1']
    #allocation5 [shape = 'u8[32768]{0}', space=vmem, size = 0x8000, scoped, tag = 'input window, operand 1, single buffered']
    #allocation6 [shape = 's32[1]{0}', space=sflag, size = 0x4, scoped, tag = 'scoped memory for tpu_custom_call.1']
    #allocation7 [shape = 'u8[32768]{0}', space=vmem, size = 0x8000, scoped, tag = 'input window, operand 3, single buffered']
    #allocation8 [shape = 'u8[32768]{0}', space=vmem, size = 0x8000, scoped, tag = 'input window, operand 5, single buffered']
    #allocation9 [shape = 's32[1]{0}', space=sflag, size = 0x4, scoped, tag = 'scoped memory for tpu_custom_call.1']
    #allocation10 [shape = 'u8[32768]{0}', space=vmem, size = 0x8000, scoped, tag = 'input window, operand 7, single buffered']
    #allocation11 [shape = 'u8[4096]{0}', space=vmem, size = 0x1000, scoped, tag = 'output window, operand 0, single buffered']
    %14 = vsyncpa [#allocation3], 0
    %15 = vsyncpa [#allocation6], 0
    %16 = vsyncpa [#allocation9], 0
    %17 = vsyncpa [#allocation4], 0
    // Predicated region
    $region2: #{tpu_custom_call.1} parent=1 // pred_check
      _
    $region3: #{tpu_custom_call.1} parent=1 // pred_check_branch
      %19 = sbr.rel (0) target = $region5
    $region4: #{tpu_custom_call.1} parent=1 // pred_region
      %21 = vsyncadd [#allocation3], 0
      %s23 = sshll.u32 %s0, 4
      %s24 = int_to_ptr.hbm [resolvable:$true] %s23
      %s25 = sshll.u32 [#allocation2], 4
      %s26 = int_to_ptr.vmem [resolvable:$true] %s25
      %28 = dma.hbm_to_vmem [thread:$0]  %s24, 128, %s26, [#allocation3]
    $region5: #{tpu_custom_call.1} parent=1 // pred_fallthru
      _
    // Predicated region
    $region6: #{tpu_custom_call.1} parent=1 // pred_check
      _
    $region7: #{tpu_custom_call.1} parent=1 // pred_check_branch
      %30 = sbr.rel (0) target = $region9
    $region8: #{tpu_custom_call.1} parent=1 // pred_region
      %32 = vsyncadd [#allocation6], 0
      %s33 = sshll.u32 %s1, 4
      %s34 = int_to_ptr.hbm [resolvable:$true] %s33
      %s35 = sshll.u32 [#allocation5], 4
      %s36 = int_to_ptr.vmem [resolvable:$true] %s35
      %41 = dma.hbm_to_vmem [thread:$0]  %s34, 1024, %s36, [#allocation6], 64, 64, 4
    $region9: #{tpu_custom_call.1} parent=1 // pred_fallthru
      _
    // Predicated region
    $region10: #{tpu_custom_call.1} parent=1 // pred_check
      _
    $region11: #{tpu_custom_call.1} parent=1 // pred_check_branch
      %43 = sbr.rel (0) target = $region13
    $region12: #{tpu_custom_call.1} parent=1 // pred_region
      _
    $region13: #{tpu_custom_call.1} parent=1 // pred_fallthru
      _
    // Predicated region
    $region14: #{tpu_custom_call.1} parent=1 // pred_check
      _
    $region15: #{tpu_custom_call.1} parent=1 // pred_check_branch
      %45 = sbr.rel (0) target = $region17
    $region16: #{tpu_custom_call.1} parent=1 // pred_region
      %47 = vsyncadd [#allocation6], 0
      %s48 = sshll.u32 %s3, 4
      %s49 = int_to_ptr.hbm [resolvable:$true] %s48
      %s50 = sshll.u32 [#allocation7], 4
      %s51 = int_to_ptr.vmem [resolvable:$true] %s50
      %56 = dma.hbm_to_vmem [thread:$0]  %s49, 1024, %s51, [#allocation6], 64, 64, 4
    $region17: #{tpu_custom_call.1} parent=1 // pred_fallthru
      _
    // Predicated region
    $region18: #{tpu_custom_call.1} parent=1 // pred_check
      _
    $region19: #{tpu_custom_call.1} parent=1 // pred_check_branch
      %58 = sbr.rel (0) target = $region21
    $region20: #{tpu_custom_call.1} parent=1 // pred_region
      _
    $region21: #{tpu_custom_call.1} parent=1 // pred_fallthru
      _
    // Predicated region
    $region22: #{tpu_custom_call.1} parent=1 // pred_check
      _
    $region23: #{tpu_custom_call.1} parent=1 // pred_check_branch
      %60 = sbr.rel (0) target = $region25
    $region24: #{tpu_custom_call.1} parent=1 // pred_region
      %62 = vsyncadd [#allocation9], 0
      %s63 = sshll.u32 %s5, 4
      %s64 = int_to_ptr.hbm [resolvable:$true] %s63
      %s65 = sshll.u32 [#allocation8], 4
      %s66 = int_to_ptr.vmem [resolvable:$true] %s65
      %71 = dma.hbm_to_vmem [thread:$0]  %s64, 1024, %s66, [#allocation9], 64, 64, 4
    $region25: #{tpu_custom_call.1} parent=1 // pred_fallthru
      _
    // Predicated region
    $region26: #{tpu_custom_call.1} parent=1 // pred_check
      _
    $region27: #{tpu_custom_call.1} parent=1 // pred_check_branch
      %73 = sbr.rel (0) target = $region29
    $region28: #{tpu_custom_call.1} parent=1 // pred_region
      _
    $region29: #{tpu_custom_call.1} parent=1 // pred_fallthru
      _
    // Predicated region
    $region30: #{tpu_custom_call.1} parent=1 // pred_check
      _
    $region31: #{tpu_custom_call.1} parent=1 // pred_check_branch
      %75 = sbr.rel (0) target = $region33
    $region32: #{tpu_custom_call.1} parent=1 // pred_region
      %77 = vsyncadd [#allocation9], 0
      %s78 = sshll.u32 %s7, 4
      %s79 = int_to_ptr.hbm [resolvable:$true] %s78
      %s80 = sshll.u32 [#allocation10], 4
      %s81 = int_to_ptr.vmem [resolvable:$true] %s80
      %86 = dma.hbm_to_vmem [thread:$0]  %s79, 1024, %s81, [#allocation9], 64, 64, 4
    $region33: #{tpu_custom_call.1} parent=1 // pred_fallthru
      _
    // Predicated region
    $region34: #{tpu_custom_call.1} parent=1 // pred_check
      _
    $region35: #{tpu_custom_call.1} parent=1 // pred_check_branch
      %88 = sbr.rel (0) target = $region37
    $region36: #{tpu_custom_call.1} parent=1 // pred_region
      _
    $region37: #{tpu_custom_call.1} parent=1 // pred_fallthru
      _
    // Predicated region
    $region38: #{tpu_custom_call.1} parent=1 // pred_check
      _
    $region39: #{tpu_custom_call.1} parent=1 // pred_check_branch
      %90 = sbr.rel (0) target = $region41
    $region40: #{tpu_custom_call.1} parent=1 // pred_region
      %92 = dma.done [#allocation3], 128
    $region41: #{tpu_custom_call.1} parent=1 // pred_fallthru
      _
    // Predicated region
    $region42: #{tpu_custom_call.1} parent=1 // pred_check
      _
    $region43: #{tpu_custom_call.1} parent=1 // pred_check_branch
      %94 = sbr.rel (0) target = $region45
    $region44: #{tpu_custom_call.1} parent=1 // pred_region
      %96 = dma.done [#allocation6], 1024
    $region45: #{tpu_custom_call.1} parent=1 // pred_fallthru
      _
    // Predicated region
    $region46: #{tpu_custom_call.1} parent=1 // pred_check
      _
    $region47: #{tpu_custom_call.1} parent=1 // pred_check_branch
      %98 = sbr.rel (0) target = $region49
    $region48: #{tpu_custom_call.1} parent=1 // pred_region
      %100 = dma.done [#allocation6], 1024
    $region49: #{tpu_custom_call.1} parent=1 // pred_fallthru
      _
    // Predicated region
    $region50: #{tpu_custom_call.1} parent=1 // pred_check
      _
    $region51: #{tpu_custom_call.1} parent=1 // pred_check_branch
      %102 = sbr.rel (0) target = $region53
    $region52: #{tpu_custom_call.1} parent=1 // pred_region
      %104 = dma.done [#allocation9], 1024
    $region53: #{tpu_custom_call.1} parent=1 // pred_fallthru
      _
    // Predicated region
    $region54: #{tpu_custom_call.1} parent=1 // pred_check
      _
    $region55: #{tpu_custom_call.1} parent=1 // pred_check_branch
      %106 = sbr.rel (0) target = $region57
    $region56: #{tpu_custom_call.1} parent=1 // pred_region
      %108 = dma.done [#allocation9], 1024
    $region57: #{tpu_custom_call.1} parent=1 // pred_fallthru
      _
    %v109 = vld [vmem:[#allocation2] sm:$0xff]
    %v110 = vpack.c.bf16 %v109, %v109
    %v111 = vld [vmem:[#allocation5] sm:$0xf]
    %v112 = vld [vmem:[#allocation5 + $0x4] sm:$0xf]
    %v113 = vld [vmem:[#allocation5 + $0x8] sm:$0xf]
    %v114 = vld [vmem:[#allocation5 + $0xc] sm:$0xf]
    %v115 = vld [vmem:[#allocation5 + $0x10] sm:$0xf]
    %v116 = vld [vmem:[#allocation5 + $0x14] sm:$0xf]
    %v117 = vld [vmem:[#allocation5 + $0x18] sm:$0xf]
    %v118 = vld [vmem:[#allocation5 + $0x1c] sm:$0xf]
    %v119 = vld [vmem:[#allocation5 + $0x20] sm:$0xf]
    %v120 = vld [vmem:[#allocation5 + $0x24] sm:$0xf]
    %v121 = vld [vmem:[#allocation5 + $0x28] sm:$0xf]
    %v122 = vld [vmem:[#allocation5 + $0x2c] sm:$0xf]
    %v123 = vld [vmem:[#allocation5 + $0x30] sm:$0xf]
    %v124 = vld [vmem:[#allocation5 + $0x34] sm:$0xf]
    %v125 = vld [vmem:[#allocation5 + $0x38] sm:$0xf]
    %v126 = vld [vmem:[#allocation5 + $0x3c] sm:$0xf]
    %v127 = vld [vmem:[%s2] sm:$0x1]
    %v129 = vperm.slane %v127, 0
    %v147 = vunpack.c.l.b16 %v111
    %v148 = vunpack.c.l.b16 %v112
    %v149 = vunpack.c.l.b16 %v113
    %v150 = vunpack.c.l.b16 %v114
    %v151 = vunpack.c.l.b16 %v115
    %v152 = vunpack.c.l.b16 %v116
    %v153 = vunpack.c.l.b16 %v117
    %v154 = vunpack.c.l.b16 %v118
    %v155 = vunpack.c.l.b16 %v119
    %v156 = vunpack.c.l.b16 %v120
    %v157 = vunpack.c.l.b16 %v121
    %v158 = vunpack.c.l.b16 %v122
    %v159 = vunpack.c.l.b16 %v123
    %v160 = vunpack.c.l.b16 %v124
    %v161 = vunpack.c.l.b16 %v125
    %v162 = vunpack.c.l.b16 %v126
    %v163 = vpack.c.b16 %v148, %v147
    %v164 = vpack.c.b16 %v150, %v149
    %v165 = vpack.c.b16 %v152, %v151
    %v166 = vpack.c.b16 %v154, %v153
    %v167 = vpack.c.b16 %v156, %v155
    %v168 = vpack.c.b16 %v158, %v157
    %v169 = vpack.c.b16 %v160, %v159
    %v170 = vpack.c.b16 %v162, %v161
    %179 = vmatpush.bf16.msra.mxu0 %v170
    %180 = vmatpush.bf16.msra.mxu0 %v169
    %181 = vmatpush.bf16.msra.mxu0 %v168
    %182 = vmatpush.bf16.msra.mxu0 %v167
    %183 = vmatpush.bf16.msra.mxu0 %v166
    %184 = vmatpush.bf16.msra.mxu0 %v165
    %185 = vmatpush.bf16.msra.mxu0 %v164
    %186 = vmatpush.bf16.msra.mxu0 %v163
    %187 = vmatmul.bf16.gmra.mxu0 %v110
    %v188 = vpop.f32.mrf.mxu0
    %v189 = vadd.f32 %v129, %v188
    %v190 = vpop.f32.mrf.mxu0
    %191 = vdwg.mxu0
    %v192 = vmax.f32 %v189, 0.0
    %v193 = vpack.c.bf16 %v192, %v192
    %v194 = vld [vmem:[#allocation7] sm:$0xf]
    %v195 = vld [vmem:[#allocation7 + $0x4] sm:$0xf]
    %v196 = vld [vmem:[#allocation7 + $0x8] sm:$0xf]
    %v197 = vld [vmem:[#allocation7 + $0xc] sm:$0xf]
    %v198 = vld [vmem:[#allocation7 + $0x10] sm:$0xf]
    %v199 = vld [vmem:[#allocation7 + $0x14] sm:$0xf]
    %v200 = vld [vmem:[#allocation7 + $0x18] sm:$0xf]
    %v201 = vld [vmem:[#allocation7 + $0x1c] sm:$0xf]
    %v202 = vld [vmem:[#allocation7 + $0x20] sm:$0xf]
    %v203 = vld [vmem:[#allocation7 + $0x24] sm:$0xf]
    %v204 = vld [vmem:[#allocation7 + $0x28] sm:$0xf]
    %v205 = vld [vmem:[#allocation7 + $0x2c] sm:$0xf]
    %v206 = vld [vmem:[#allocation7 + $0x30] sm:$0xf]
    %v207 = vld [vmem:[#allocation7 + $0x34] sm:$0xf]
    %v208 = vld [vmem:[#allocation7 + $0x38] sm:$0xf]
    %v209 = vld [vmem:[#allocation7 + $0x3c] sm:$0xf]
    %v210 = vld [vmem:[%s4] sm:$0x1]
    %v212 = vperm.slane %v210, 0
    %v230 = vunpack.c.l.b16 %v194
    %v231 = vunpack.c.l.b16 %v195
    %v232 = vunpack.c.l.b16 %v196
    %v233 = vunpack.c.l.b16 %v197
    %v234 = vunpack.c.l.b16 %v198
    %v235 = vunpack.c.l.b16 %v199
    %v236 = vunpack.c.l.b16 %v200
    %v237 = vunpack.c.l.b16 %v201
    %v238 = vunpack.c.l.b16 %v202
    %v239 = vunpack.c.l.b16 %v203
    %v240 = vunpack.c.l.b16 %v204
    %v241 = vunpack.c.l.b16 %v205
    %v242 = vunpack.c.l.b16 %v206
    %v243 = vunpack.c.l.b16 %v207
    %v244 = vunpack.c.l.b16 %v208
    %v245 = vunpack.c.l.b16 %v209
    %v246 = vpack.c.b16 %v231, %v230
    %v247 = vpack.c.b16 %v233, %v232
    %v248 = vpack.c.b16 %v235, %v234
    %v249 = vpack.c.b16 %v237, %v236
    %v250 = vpack.c.b16 %v239, %v238
    %v251 = vpack.c.b16 %v241, %v240
    %v252 = vpack.c.b16 %v243, %v242
    %v253 = vpack.c.b16 %v245, %v244
    %262 = vmatpush.bf16.msra.mxu0 %v253
    %263 = vmatpush.bf16.msra.mxu0 %v252
    %264 = vmatpush.bf16.msra.mxu0 %v251
    %265 = vmatpush.bf16.msra.mxu0 %v250
    %266 = vmatpush.bf16.msra.mxu0 %v249
    %267 = vmatpush.bf16.msra.mxu0 %v248
    %268 = vmatpush.bf16.msra.mxu0 %v247
    %269 = vmatpush.bf16.msra.mxu0 %v246
    %270 = vmatmul.bf16.gmra.mxu0 %v193
    %v271 = vpop.f32.mrf.mxu0
    %v272 = vadd.f32 %v212, %v271
    %v273 = vpop.f32.mrf.mxu0
    %274 = vdwg.mxu0
    %v275 = vmax.f32 %v272, 0.0
    %v276 = vpack.c.bf16 %v275, %v275
    %v277 = vld [vmem:[#allocation8] sm:$0xf]
    %v278 = vld [vmem:[#allocation8 + $0x4] sm:$0xf]
    %v279 = vld [vmem:[#allocation8 + $0x8] sm:$0xf]
    %v280 = vld [vmem:[#allocation8 + $0xc] sm:$0xf]
    %v281 = vld [vmem:[#allocation8 + $0x10] sm:$0xf]
    %v282 = vld [vmem:[#allocation8 + $0x14] sm:$0xf]
    %v283 = vld [vmem:[#allocation8 + $0x18] sm:$0xf]
    %v284 = vld [vmem:[#allocation8 + $0x1c] sm:$0xf]
    %v285 = vld [vmem:[#allocation8 + $0x20] sm:$0xf]
    %v286 = vld [vmem:[#allocation8 + $0x24] sm:$0xf]
    %v287 = vld [vmem:[#allocation8 + $0x28] sm:$0xf]
    %v288 = vld [vmem:[#allocation8 + $0x2c] sm:$0xf]
    %v289 = vld [vmem:[#allocation8 + $0x30] sm:$0xf]
    %v290 = vld [vmem:[#allocation8 + $0x34] sm:$0xf]
    %v291 = vld [vmem:[#allocation8 + $0x38] sm:$0xf]
    %v292 = vld [vmem:[#allocation8 + $0x3c] sm:$0xf]
    %v293 = vld [vmem:[%s6] sm:$0x1]
    %v295 = vperm.slane %v293, 0
    %v313 = vunpack.c.l.b16 %v277
    %v314 = vunpack.c.l.b16 %v278
    %v315 = vunpack.c.l.b16 %v279
    %v316 = vunpack.c.l.b16 %v280
    %v317 = vunpack.c.l.b16 %v281
    %v318 = vunpack.c.l.b16 %v282
    %v319 = vunpack.c.l.b16 %v283
    %v320 = vunpack.c.l.b16 %v284
    %v321 = vunpack.c.l.b16 %v285
    %v322 = vunpack.c.l.b16 %v286
    %v323 = vunpack.c.l.b16 %v287
    %v324 = vunpack.c.l.b16 %v288
    %v325 = vunpack.c.l.b16 %v289
    %v326 = vunpack.c.l.b16 %v290
    %v327 = vunpack.c.l.b16 %v291
    %v328 = vunpack.c.l.b16 %v292
    %v329 = vpack.c.b16 %v314, %v313
    %v330 = vpack.c.b16 %v316, %v315
    %v331 = vpack.c.b16 %v318, %v317
    %v332 = vpack.c.b16 %v320, %v319
    %v333 = vpack.c.b16 %v322, %v321
    %v334 = vpack.c.b16 %v324, %v323
    %v335 = vpack.c.b16 %v326, %v325
    %v336 = vpack.c.b16 %v328, %v327
    %345 = vmatpush.bf16.msra.mxu0 %v336
    %346 = vmatpush.bf16.msra.mxu0 %v335
    %347 = vmatpush.bf16.msra.mxu0 %v334
    %348 = vmatpush.bf16.msra.mxu0 %v333
    %349 = vmatpush.bf16.msra.mxu0 %v332
    %350 = vmatpush.bf16.msra.mxu0 %v331
    %351 = vmatpush.bf16.msra.mxu0 %v330
    %352 = vmatpush.bf16.msra.mxu0 %v329
    %353 = vmatmul.bf16.gmra.mxu0 %v276
    %v354 = vpop.f32.mrf.mxu0
    %v355 = vadd.f32 %v295, %v354
    %v356 = vpop.f32.mrf.mxu0
    %357 = vdwg.mxu0
    %v358 = vmax.f32 %v355, 0.0
    %v359 = vpack.c.bf16 %v358, %v358
    %v360 = vld [vmem:[#allocation10] sm:$0xf]
    %v361 = vld [vmem:[#allocation10 + $0x4] sm:$0xf]
    %v362 = vld [vmem:[#allocation10 + $0x8] sm:$0xf]
    %v363 = vld [vmem:[#allocation10 + $0xc] sm:$0xf]
    %v364 = vld [vmem:[#allocation10 + $0x10] sm:$0xf]
    %v365 = vld [vmem:[#allocation10 + $0x14] sm:$0xf]
    %v366 = vld [vmem:[#allocation10 + $0x18] sm:$0xf]
    %v367 = vld [vmem:[#allocation10 + $0x1c] sm:$0xf]
    %v368 = vld [vmem:[#allocation10 + $0x20] sm:$0xf]
    %v369 = vld [vmem:[#allocation10 + $0x24] sm:$0xf]
    %v370 = vld [vmem:[#allocation10 + $0x28] sm:$0xf]
    %v371 = vld [vmem:[#allocation10 + $0x2c] sm:$0xf]
    %v372 = vld [vmem:[#allocation10 + $0x30] sm:$0xf]
    %v373 = vld [vmem:[#allocation10 + $0x34] sm:$0xf]
    %v374 = vld [vmem:[#allocation10 + $0x38] sm:$0xf]
    %v375 = vld [vmem:[#allocation10 + $0x3c] sm:$0xf]
    %v376 = vld [vmem:[%s8] sm:$0x1]
    %v378 = vperm.slane %v376, 0
    %v396 = vunpack.c.l.b16 %v360
    %v397 = vunpack.c.l.b16 %v361
    %v398 = vunpack.c.l.b16 %v362
    %v399 = vunpack.c.l.b16 %v363
    %v400 = vunpack.c.l.b16 %v364
    %v401 = vunpack.c.l.b16 %v365
    %v402 = vunpack.c.l.b16 %v366
    %v403 = vunpack.c.l.b16 %v367
    %v404 = vunpack.c.l.b16 %v368
    %v405 = vunpack.c.l.b16 %v369
    %v406 = vunpack.c.l.b16 %v370
    %v407 = vunpack.c.l.b16 %v371
    %v408 = vunpack.c.l.b16 %v372
    %v409 = vunpack.c.l.b16 %v373
    %v410 = vunpack.c.l.b16 %v374
    %v411 = vunpack.c.l.b16 %v375
    %v412 = vpack.c.b16 %v397, %v396
    %v413 = vpack.c.b16 %v399, %v398
    %v414 = vpack.c.b16 %v401, %v400
    %v415 = vpack.c.b16 %v403, %v402
    %v416 = vpack.c.b16 %v405, %v404
    %v417 = vpack.c.b16 %v407, %v406
    %v418 = vpack.c.b16 %v409, %v408
    %v419 = vpack.c.b16 %v411, %v410
    %428 = vmatpush.bf16.msra.mxu0 %v419
    %429 = vmatpush.bf16.msra.mxu0 %v418
    %430 = vmatpush.bf16.msra.mxu0 %v417
    %431 = vmatpush.bf16.msra.mxu0 %v416
    %432 = vmatpush.bf16.msra.mxu0 %v415
    %433 = vmatpush.bf16.msra.mxu0 %v414
    %434 = vmatpush.bf16.msra.mxu0 %v413
    %435 = vmatpush.bf16.msra.mxu0 %v412
    %436 = vmatmul.bf16.gmra.mxu0 %v359
    %v437 = vpop.f32.mrf.mxu0
    %v438 = vadd.f32 %v378, %v437
    %v439 = vpop.f32.mrf.mxu0
    %440 = vdwg.mxu0
    %v441 = vxor.u32 %v438, 2147483648
    %v442 = vmul.f32 %v441, 1.442695
    %v443 = vpow.pop %v442
    %v444 = vadd.f32 %v443, 1.0
    %v445 = vrcp.pop %v444
    %v446 = vmul.f32 %v444, %v445
    %v447 = vsub.f32 1.0, %v446
    %v448 = vmul.f32 %v445, %v447
    %v449 = vadd.f32 %v445, %v448
    %vm450 = vweird.f32 %v444
    %vm451 = vweird.f32 %v445
    %vm452 = vmor %vm450, %vm451
    %v453 = vsel %vm452, %v445, %v449
    %v454 = vand.u32 2147483647, %v444
    %vm455 = vcmp.eq.f32.partialorder %v454, 8.507059e+37
    %v456 = vand.u32 %v444, 2147483648
    %v457 = vor.u32 1.1754944e-38, %v456
    %v458 = vsel %vm455, %v457, %v453
    %v459 = vmul.f32 1.0, %v458
    %460 = vst [vmem:[#allocation11] sm:$0xff] %v459
    // Predicated region
    $region58: #{tpu_custom_call.1} parent=1 // pred_check
      _
    $region59: #{tpu_custom_call.1} parent=1 // pred_check_branch
      %462 = sbr.rel (0) target = $region61
    $region60: #{tpu_custom_call.1} parent=1 // pred_region
      %464 = vsyncadd [#allocation4], 0
      %s466 = sshll.u32 [#allocation11], 4
      %s467 = int_to_ptr.vmem [resolvable:$true] %s466
      %s468 = sshll.u32 %s9, 4
      %s469 = int_to_ptr.hbm [resolvable:$true] %s468
      %471 = dma.vmem_to_hbm [thread:$0]  %s467, 128, %s469, [#allocation4]
    $region61: #{tpu_custom_call.1} parent=1 // pred_fallthru
      _
    // Predicated region
    $region62: #{tpu_custom_call.1} parent=1 // pred_check
      _
    $region63: #{tpu_custom_call.1} parent=1 // pred_check_branch
      %473 = sbr.rel (0) target = $region65
    $region64: #{tpu_custom_call.1} parent=1 // pred_region
      %475 = dma.done [#allocation4], 128
    $region65: #{tpu_custom_call.1} parent=1 // pred_fallthru
      _
    %476 = vsyncpa [#allocation3], 1
    %477 = vsyncpa [#allocation6], 1
    %478 = vsyncpa [#allocation9], 1
    %479 = vsyncpa [#allocation4], 1

</llo_original>
